<compile_context>
chip_gen: v6e
topology: v6e:2x2x1
jax: 0.10.0
libtpu: 0.0.40
codegen_flags: <defaults>
</compile_context>

<pallas_src>
import functools

import jax
import jax.numpy as jnp
import numpy as np
from jax.experimental import pallas as pl
from jax.experimental.pallas import tpu as pltpu

K = 7           # effective kernel size
PAD = K // 2    # "same" padding

_ROLL_SIGN_CACHE = {}


def _roll_sign():
    """One-time (per backend) probe of pltpu.roll's rotation convention.

    Returns +1 if pltpu.roll(v, s) == jnp.roll(v, s) (positive shift moves elements
    toward higher indices), -1 if reversed.  Cached per backend so an interpret-mode
    or multi-backend process can't bake a wrong sign into the production kernel.
    """
    backend = jax.default_backend()
    if backend not in _ROLL_SIGN_CACHE:
        def probe(x_ref, o_ref):
            o_ref[...] = pltpu.roll(x_ref[...], 1, axis=1)

        x = jnp.broadcast_to(jnp.arange(128, dtype=jnp.float32), (8, 128))
        y = np.asarray(jax.block_until_ready(
            pl.pallas_call(probe,
                           out_shape=jax.ShapeDtypeStruct((8, 128), jnp.float32))(x)))
        _ROLL_SIGN_CACHE[backend] = 1 if float(y[0, 1]) == 0.0 else -1
    return _ROLL_SIGN_CACHE[backend]


def _vmem_capacity_bytes():
    """Physical VMEM of the current part (v5e/v6e: 128 MiB, v7x: 64 MiB/TC)."""
    try:
        return int(pltpu.get_tpu_info().vmem_capacity_bytes)
    except Exception:
        return 64 << 20   # conservative default (v7x per-TC VMEM)


def _build_masks(H, W):
    """Edge-validity masks, shape (2K, H*W) f32.

    Row dx   (0..K-1): column validity for x-offset rx = dx-PAD.
    Row K+dy (0..K-1): row validity for y-offset ry = dy-PAD.
    Precomputed on the host and kept resident in VMEM (constant index_map).
    """
    col = np.arange(H * W) % W
    row = np.arange(H * W) // W
    cm = [((col + (dx - PAD) >= 0) & (col + (dx - PAD) < W)) for dx in range(K)]
    rm = [((row + (dy - PAD) >= 0) & (row + (dy - PAD) < H)) for dy in range(K)]
    return jnp.asarray(np.stack(cm + rm, axis=0).astype(np.float32))


def spatial_attention_kernel(w_ref, m_ref, x_ref, o_ref, *, H, W, C, roll_sign):
    """One (Nb, C, H*W) lane-dense block per grid step.

    w_ref : SMEM f32[2*K*K]      effective 7x7 conv weights, [c, dy, dx] order
    m_ref : VMEM f32[2K, HW]     precomputed edge masks (resident, constant index_map)
    x_ref : VMEM [Nb, C, HW]     input block
    o_ref : VMEM [Nb, C, HW]     output block
    """
    HW = H * W
    Nb = x_ref.shape[0]
    f32 = jnp.float32

    # ---- channel mean / max -> (Nb, HW) f32 -------------------------------------
    # For larger C, accumulate over C chunks so no full-block f32 copy is ever live
    # (matters for bf16 inputs under v7x's 64 MiB VMEM).
    C_CHUNK = 8
    if C > C_CHUNK and C % C_CHUNK == 0:
        def body(i, carry):
            s, m = carry
            c0 = pl.multiple_of(i * C_CHUNK, C_CHUNK)
            chunk = x_ref[:, pl.ds(c0, C_CHUNK), :]
            s = s + jnp.sum(chunk.astype(f32), axis=1)
            m = jnp.maximum(m, jnp.max(chunk, axis=1).astype(f32))
            return s, m

        ssum, mx = jax.lax.fori_loop(
            0, C // C_CHUNK, body,
            (jnp.zeros((Nb, HW), f32), jnp.full((Nb, HW), -jnp.inf, f32)))
        avg = ssum * (1.0 / C)
    else:
        xs = x_ref[...]
        avg = jnp.mean(xs.astype(f32), axis=1)
        mx = jnp.max(xs, axis=1).astype(f32)

    # ---- resident masks -> booleans once per step --------------------------------
    masks = m_ref[...] > 0.5                      # (2K, HW) bool

    # Hoist all 98 scalar weights out of the conv loops (one SMEM read each).
    w = [w_ref[i] for i in range(2 * K * K)]

    def lane_roll(v, jnp_shift):
        # rolled[q] = v[(q - jnp_shift) mod HW]  (jnp.roll convention), on the XLU.
        s = (roll_sign * jnp_shift) % HW
        return v if s == 0 else pltpu.roll(v, s, axis=1)

    # ---- factored 7x7 cross-correlation (zero "same" padding) --------------------
    # Column-shifted, column-masked planes built ONCE: 2*6 = 12 lane rolls.
    # (dx == PAD needs no roll and no mask.)  jnp.where keeps zero-padded semantics
    # exact even if the wrapped-around source pixels are inf/NaN.
    zc = []
    for ych in (avg, mx):
        planes = []
        for dx in range(K):
            rx = dx - PAD
            if rx == 0:
                planes.append(ych)
            else:
                planes.append(jnp.where(masks[dx:dx + 1, :], lane_roll(ych, -rx), 0.0))
        zc.append(planes)

    # Per-dy inner sums, then ONE row roll + row mask per dy: 6 more rolls.
    acc = jnp.zeros((Nb, HW), f32)
    for dy in range(K):
        ry = dy - PAD
        inner = jnp.zeros((Nb, HW), f32)
        for c in range(2):
            base = c * K * K + dy * K
            for dx in range(K):
                inner = inner + w[base + dx] * zc[c][dx]
        if ry == 0:
            acc = acc + inner
        else:
            rolled = lane_roll(inner, -ry * W)
            acc = acc + jnp.where(masks[K + dy:K + dy + 1, :], rolled, 0.0)

    # ---- modulate: out = x * sigmoid(acc) -----------------------------------------
    ax = jax.nn.sigmoid(acc)                      # (Nb, HW) f32 (EUP)
    # Downcast ax once and multiply in the input dtype (bf16-native VALU on v6e/v7x,
    # identical to the f32 path for f32 inputs).
    o_ref[...] = (x_ref[...] * ax.astype(o_ref.dtype)[:, None, :]).astype(o_ref.dtype)


def _pick_batch_block(n, c, hw, itemsize, vmem_cap):
    """Largest divisor Nb of n such that the x block fits the per-block budget
    (~VMEM/16, generation-aware) AND the grid keeps >= min(n, 4) steps so the
    DMA pipeline has depth and both v7x TensorCores get work."""
    budget = max(vmem_cap // 16, 2 << 20)
    per_batch_block = c * hw * itemsize
    min_steps = min(n, 4)
    best = 1
    for nb in range(1, n + 1):
        if n % nb:
            continue
        if n // nb < min_steps:
            break                       # nb ascending -> all larger nb also fail
        if nb * per_batch_block <= budget:
            best = nb
    # TODO(synk): if even nb=1 exceeds the budget, fall back to C- or HW-tiling
    # (partial mean/max accumulators or a 3-row-halo spatial split) instead of
    # relying on a single oversized block.
    return best


def spatial_attention(x, w_flat, batch_block=None):
    """x: [N, C, H, W], w_flat: f32[2*K*K] -> [N, C, H, W]."""
    N, C, H, W = x.shape
    HW = H * W
    itemsize = jnp.dtype(x.dtype).itemsize
    vmem_cap = _vmem_capacity_bytes()

    if batch_block is None:
        batch_block = _pick_batch_block(N, C, HW, itemsize, vmem_cap)
    Nb = batch_block
    assert N % Nb == 0, "batch_block must divide the batch size"

    masks = _build_masks(H, W)                      # (2K, HW) f32, resident in VMEM

    # VMEM budget: in + out blocks double-buffered, plus ~20 (Nb,HW) f32 temporaries
    # (zc planes, acc/inner/avg/max/ax) and the resident mask block, plus headroom.
    block_io = Nb * C * HW * itemsize
    f32_temps = (20 * Nb * HW + 2 * K * HW) * 4
    vmem_limit = 2 * 2 * block_io + f32_temps + (4 << 20)
    vmem_limit = int(max(16 << 20, min(vmem_limit, (vmem_cap * 3) // 4)))

    xf = x.reshape(N, C, HW)          # free: NCHW is contiguous over (H, W)
    kernel = functools.partial(spatial_attention_kernel, H=H, W=W, C=C,
                               roll_sign=_roll_sign())

    out = pl.pallas_call(
        kernel,
        out_shape=jax.ShapeDtypeStruct((N, C, HW), x.dtype),
        grid_spec=pltpu.PrefetchScalarGridSpec(
            num_scalar_prefetch=0,
            grid=(N // Nb,),
            in_specs=[
                pl.BlockSpec(memory_space=pltpu.MemorySpace.SMEM),       # weights
                pl.BlockSpec((2 * K, HW), lambda n: (0, 0)),             # masks (resident)
                pl.BlockSpec((Nb, C, HW), lambda n: (n, 0, 0)),          # x (lane-dense)
            ],
            out_specs=pl.BlockSpec((Nb, C, HW), lambda n: (n, 0, 0)),
        ),
        compiler_params=pltpu.CompilerParams(
            dimension_semantics=("parallel",),      # batch axis: shard across v7x TCs
            vmem_limit_bytes=vmem_limit,
        ),
        cost_estimate=pl.CostEstimate(
            flops=int(N * HW * (2 * C + 4 * K * K + 4)),
            transcendentals=int(N * HW),
            bytes_accessed=int(2 * N * C * HW * itemsize + 2 * K * HW * 4),
        ),
    )(w_flat, masks, xf)
    return out.reshape(N, C, H, W)


def build_effective_weight(w7, w5, w3, w1):
    """Sum the four zero-bias conv kernels into one (2, 7, 7) effective kernel.

    w7: (1,2,7,7), w5: (1,2,5,5), w3: (1,2,3,3), w1: (1,2,1,1)  (OIHW, O=1, I=2)
    """
    w_eff = jnp.zeros((2, K, K), jnp.float32)
    w_eff = w_eff + w7[0]
    w_eff = w_eff.at[:, 1:6, 1:6].add(w5[0])
    w_eff = w_eff.at[:, 2:5, 2:5].add(w3[0])
    w_eff = w_eff.at[:, 3:4, 3:4].add(w1[0])
    return w_eff.reshape(-1)  # flatten in [c, dy, dx] order


def ref_forward(x, w7, w5, w3, w1):
    """Pure-JAX reference mirroring the PyTorch forward exactly."""
    avg = jnp.mean(x, axis=1, keepdims=True)
    mx = jnp.max(x, axis=1, keepdims=True)
    y = jnp.concatenate([avg, mx], axis=1)

    def conv(inp, w, p):
        return jax.lax.conv_general_dilated(
            inp, w, window_strides=(1, 1), padding=[(p, p), (p, p)],
            dimension_numbers=("NCHW", "OIHW", "NCHW"))

    s = conv(y, w7, 3) + conv(y, w5, 2) + conv(y, w3, 1) + conv(y, w1, 0)
    return x * jax.nn.sigmoid(s)


if __name__ == "__main__":
    key = jax.random.PRNGKey(0)
    kx, k7, k5, k3, k1 = jax.random.split(key, 5)

    # Small, module-consistent shapes; auto block sizing picks Nb=2 -> grid of 4 steps.
    N, C, H, W = 8, 4, 16, 16
    x = jax.random.normal(kx, (N, C, H, W), dtype=jnp.float32)

    # Deterministic synthetic conv weights (Conv2d(2,1,k,bias=False) -> OIHW).
    w7 = jax.random.normal(k7, (1, 2, 7, 7), dtype=jnp.float32) * 0.1
    w5 = jax.random.normal(k5, (1, 2, 5, 5), dtype=jnp.float32) * 0.1
    w3 = jax.random.normal(k3, (1, 2, 3, 3), dtype=jnp.float32) * 0.1
    w1 = jax.random.normal(k1, (1, 2, 1, 1), dtype=jnp.float32) * 0.1

    w_flat = build_effective_weight(w7, w5, w3, w1)

    out = jax.block_until_ready(spatial_attention(x, w_flat))

    ref = jax.block_until_ready(ref_forward(x, w7, w5, w3, w1))
    np.testing.assert_allclose(np.asarray(out), np.asarray(ref), rtol=1e-5, atol=1e-5)

    print("KERNEL_OK")
</pallas_src>

<mosaic_0001>
module attributes {stable_mosaic.version = 11 : i64} {
  func.func @probe(%arg0: memref<8x128xf32, #tpu.memory_space<vmem>>, %arg1: memref<8x128xf32, #tpu.memory_space<vmem>>) attributes {dimension_semantics = [], scalar_prefetch = 0 : i64, scratch_operands = 0 : i64, tpu.core_type = #tpu.core_type<tc>} {
    %c0 = arith.constant 0 : index
    %c0_0 = arith.constant 0 : index
    %0 = vector.load %arg0[%c0, %c0_0] : memref<8x128xf32, #tpu.memory_space<vmem>>, vector<8x128xf32>
    %c1_i32 = arith.constant 1 : i32
    %1 = tpu.dynamic_rotate %0 by %c1_i32 dim 1 : vector<8x128xf32>, i32 -> vector<8x128xf32>
    %c0_1 = arith.constant 0 : index
    %c0_2 = arith.constant 0 : index
    %2 = vector.load %arg1[%c0_1, %c0_2] : memref<8x128xf32, #tpu.memory_space<vmem>>, vector<8x128xf32>
    tpu.vector_store %arg1[%c0_1, %c0_2], %1 {strides = array<i32>} : memref<8x128xf32, #tpu.memory_space<vmem>>, vector<8x128xf32>,
    return
  }
}

</mosaic_0001>

<llo_original>
// kernel: tpu_custom_call.1
$region0: #{tpu_custom_call.1}
  #allocation0 [shape = 'u32[]', space=smem, size = 0x4, offset = 0x4, fixed_abs, tag = 'smem constant byte address 0x4 - core index']
  #allocation1 [shape = 'u32[144,128]{1,0:T(1,128)}', space=vmem, size = 0x12000, scoped, tag = 'internal scratch']
  %s0 = inlined_call_operand.hbm [shape: f32[8,128], index: 0, kind: input, shape index: {}]
  %s1 = inlined_call_operand.hbm [shape: f32[8,128], index: 1, kind: output, shape index: {}]
  %s2 = sld [smem:[#allocation0]]
  $region18: #{tpu_custom_call.1} parent=0
    _
  %s4 = ssub.s32 1, %s2
  %s5 = scalar_select 0, %s4, %s2
  $region1: #{tpu_custom_call.1} parent=0
    #allocation2 [shape = 'u8[4096]{0}', space=vmem, size = 0x1000, scoped, tag = 'input window, operand 0, single buffered']
    #allocation3 [shape = 's32[1]{0}', space=sflag, size = 0x4, scoped, tag = 'scoped memory for tpu_custom_call.1']
    #allocation4 [shape = 's32[1]{0}', space=sflag, size = 0x4, scoped, tag = 'scoped memory for tpu_custom_call.1']
    #allocation5 [shape = 'u8[4096]{0}', space=vmem, size = 0x1000, scoped, tag = 'output window, operand 0, single buffered']
    %6 = vsyncpa [#allocation3], 0
    %7 = vsyncpa [#allocation4], 0
    // Predicated region
    $region2: #{tpu_custom_call.1} parent=1 // pred_check
      _
    $region3: #{tpu_custom_call.1} parent=1 // pred_check_branch
      %9 = sbr.rel (0) target = $region5
    $region4: #{tpu_custom_call.1} parent=1 // pred_region
      %s11 = ssub.s32 128, 128
      %12 = vsyncadd [#allocation3], %s11
      %s14 = sshll.u32 [#allocation2], 4
      %s15 = int_to_ptr.vmem [resolvable:$true] %s14
      %17 = dma.hbm_to_vmem [thread:$0]  %s0, 128, %s15, [#allocation3]
    $region5: #{tpu_custom_call.1} parent=1 // pred_fallthru
      _
    // Predicated region
    $region6: #{tpu_custom_call.1} parent=1 // pred_check
      _
    $region7: #{tpu_custom_call.1} parent=1 // pred_check_branch
      %19 = sbr.rel (0) target = $region9
    $region8: #{tpu_custom_call.1} parent=1 // pred_region
      %20 = dma.done [#allocation3], 128
    $region9: #{tpu_custom_call.1} parent=1 // pred_fallthru
      _
    %v21 = vld [vmem:[#allocation2] sm:$0xff]
    %22 = vrot.lane.b32.xlu0 %v21, 1
    %v23 = vpop.permute.xlu0 %22
    %24 = vst [vmem:[#allocation5] sm:$0xff] %v23
    // Predicated region
    $region10: #{tpu_custom_call.1} parent=1 // pred_check
      _
    $region11: #{tpu_custom_call.1} parent=1 // pred_check_branch
      %26 = sbr.rel (0) target = $region13
    $region12: #{tpu_custom_call.1} parent=1 // pred_region
      %s28 = ssub.s32 128, 128
      %29 = vsyncadd [#allocation4], %s28
      %s31 = sshll.u32 [#allocation5], 4
      %s32 = int_to_ptr.vmem [resolvable:$true] %s31
      %34 = dma.vmem_to_hbm [thread:$0]  %s32, 128, %s1, [#allocation4]
    $region13: #{tpu_custom_call.1} parent=1 // pred_fallthru
      _
    // Predicated region
    $region14: #{tpu_custom_call.1} parent=1 // pred_check
      _
    $region15: #{tpu_custom_call.1} parent=1 // pred_check_branch
      %36 = sbr.rel (0) target = $region17
    $region16: #{tpu_custom_call.1} parent=1 // pred_region
      %37 = dma.done [#allocation4], 128
    $region17: #{tpu_custom_call.1} parent=1 // pred_fallthru
      _
    %38 = vsyncpa [#allocation3], 1
    %39 = vsyncpa [#allocation4], 1

</llo_original>
